<compile_context>
chip_gen: v6e
topology: v6e:2x2x1
jax: 0.10.0
libtpu: 0.0.40
codegen_flags: <defaults>
</compile_context>

<pallas_src>
import functools

import jax
import jax.numpy as jnp
from jax.experimental import pallas as pl
from jax.experimental.pallas import tpu as pltpu


def _ce_label_smooth_kernel(x_ref, t_ref, part_ref, *, epsilon, num_classes, batch_size):
    """One batch tile: fused log-softmax + label-smoothed CE partial sum.

    x_ref    : (TB, C) logits tile in VMEM (any float dtype; upcast to f32 here)
    t_ref    : (TB, 1) int32 label tile in VMEM
    part_ref : (1, 1) f32 per-block partial sum in SMEM
    """
    TB, C = x_ref.shape

    # Row-validity mask (handles a possibly partial last batch tile).
    base = pl.program_id(0) * TB
    row_ids = base + jax.lax.broadcasted_iota(jnp.int32, (TB, 1), 0)
    valid = row_ids < batch_size                                   # (TB, 1) bool

    # Mask padded rows to 0 so all downstream math stays finite.
    x = jnp.where(valid, x_ref[...].astype(jnp.float32), 0.0)      # (TB, C)
    t = t_ref[...]                                                 # (TB, 1) int32

    # Numerically stable log-sum-exp per row.
    m = jnp.max(x, axis=1, keepdims=True)                          # (TB, 1)
    sumexp = jnp.sum(jnp.exp(x - m), axis=1, keepdims=True)        # (TB, 1)
    lse = m + jnp.log(sumexp)                                      # (TB, 1)

    # log_probs[b, c] = x[b, c] - lse[b]  (never materialized).
    # Target log-prob via iota-compare masked sum (scatter/gather equivalent).
    class_ids = jax.lax.broadcasted_iota(jnp.int32, (TB, C), 1)
    x_t = jnp.sum(jnp.where(class_ids == t, x, 0.0), axis=1, keepdims=True)
    target_lp = x_t - lse                                          # (TB, 1)

    # sum_c log_probs = sum_c x - C * lse
    sum_x = jnp.sum(x, axis=1, keepdims=True)
    sum_lp = sum_x - float(C) * lse                                # (TB, 1)

    c1 = -(1.0 - epsilon)
    c2 = -(epsilon / num_classes)
    per_row = c1 * target_lp + c2 * sum_lp                         # (TB, 1)
    per_row = jnp.where(valid, per_row, 0.0)

    part_ref[0, 0] = jnp.sum(per_row)


def _choose_block_b(batch, num_classes):
    """Largest batch tile (multiple of 8) keeping the double-buffered f32 tile <= ~32 MiB."""
    budget = 32 * 1024 * 1024
    max_tb = max(8, budget // (2 * num_classes * 4))
    max_tb = max(8, (max_tb // 8) * 8)
    tb = min(512, max_tb)
    if batch <= tb:
        return batch  # single full-extent block along batch (always a legal block shape)
    return tb


def cross_entropy_label_smooth(inputs, targets, *, num_classes, epsilon=0.1):
    """inputs: (B, num_classes) float logits (f32 or bf16); targets: (B,) int labels.

    Returns scalar f32 loss matching PyTorch CrossEntropyLabelSmooth.forward.
    """
    B, C = inputs.shape
    assert C == num_classes
    targets_2d = targets.astype(jnp.int32).reshape(B, 1)

    TB = _choose_block_b(B, C)
    num_blocks = pl.cdiv(B, TB)

    kernel = functools.partial(
        _ce_label_smooth_kernel,
        epsilon=float(epsilon),
        num_classes=int(num_classes),
        batch_size=int(B),
    )

    itemsize = jnp.dtype(inputs.dtype).itemsize
    cost = pl.CostEstimate(
        flops=5 * B * C,
        transcendentals=B * C,
        bytes_accessed=B * C * itemsize + B * 4 + num_blocks * 4,
    )

    partials = pl.pallas_call(
        kernel,
        out_shape=jax.ShapeDtypeStruct((num_blocks, 1), jnp.float32),
        grid=(num_blocks,),
        in_specs=[
            pl.BlockSpec((TB, C), lambda i: (i, 0)),   # logits tile (double-buffered)
            pl.BlockSpec((TB, 1), lambda i: (i, 0)),   # labels tile (tiny)
        ],
        out_specs=pl.BlockSpec((1, 1), lambda i: (i, 0), memory_space=pltpu.SMEM),
        compiler_params=pltpu.CompilerParams(
            dimension_semantics=("parallel",),         # independent blocks -> megacore OK
            vmem_limit_bytes=64 * 1024 * 1024,
        ),
        cost_estimate=cost,
    )(inputs, targets_2d)

    # Tiny final reduction + mean over batch outside the kernel (keeps grid parallel
    # and avoids a long serial scalar accumulation chain).
    return jnp.sum(partials) / B


def _reference(inputs, targets, num_classes, epsilon=0.1):
    log_probs = jax.nn.log_softmax(inputs.astype(jnp.float32), axis=1)
    onehot = jax.nn.one_hot(targets, num_classes, dtype=jnp.float32)
    smoothed = (1.0 - epsilon) * onehot + epsilon / num_classes
    return jnp.sum(jnp.mean(-smoothed * log_probs, axis=0))


if __name__ == "__main__":
    key = jax.random.PRNGKey(0)
    k1, k2, k3, k4 = jax.random.split(key, 4)

    # Small case (single block).
    batch, num_classes = 8, 128
    logits = jax.random.normal(k1, (batch, num_classes), dtype=jnp.float32)
    labels = jax.random.randint(k2, (batch,), 0, num_classes, dtype=jnp.int32)
    loss = cross_entropy_label_smooth(logits, labels, num_classes=num_classes, epsilon=0.1)
    loss = jax.block_until_ready(loss)
    ref = _reference(logits, labels, num_classes, epsilon=0.1)
    assert jnp.allclose(loss, ref, atol=1e-5, rtol=1e-5), (loss, ref)

    # Larger case exercising the batch grid + partial (masked) last tile.
    batch2, num_classes2 = 600, 512
    logits2 = jax.random.normal(k3, (batch2, num_classes2), dtype=jnp.float32)
    labels2 = jax.random.randint(k4, (batch2,), 0, num_classes2, dtype=jnp.int32)
    loss2 = cross_entropy_label_smooth(logits2, labels2, num_classes=num_classes2, epsilon=0.1)
    loss2 = jax.block_until_ready(loss2)
    ref2 = _reference(logits2, labels2, num_classes2, epsilon=0.1)
    assert jnp.allclose(loss2, ref2, atol=1e-4, rtol=1e-4), (loss2, ref2)

    print("KERNEL_OK")
</pallas_src>

<mosaic_0001>
module attributes {stable_mosaic.version = 11 : i64} {
  func.func @_ce_label_smooth_kernel(%arg0: i32, %arg1: memref<8x128xf32, #tpu.memory_space<vmem>>, %arg2: memref<8x1xi32, #tpu.memory_space<vmem>>, %arg3: memref<1x1xf32, #tpu.memory_space<smem>>) attributes {dimension_semantics = [#tpu.dimension_semantics<parallel>], iteration_bounds = array<i64: 1>, scalar_prefetch = 0 : i64, scratch_operands = 0 : i64, tpu.core_type = #tpu.core_type<tc>, window_params = [{transform_indices = @transform_0, window_bounds = array<i64: 8, 128>}, {transform_indices = @transform_1, window_bounds = array<i64: 8, 1>}, {transform_indices = @transform_2, window_bounds = array<i64: 1, 1>}]} {
    %c8_i32 = arith.constant 8 : i32
    %0 = arith.muli %arg0, %c8_i32 : i32
    %1 = tpu.iota {dimensions = array<i32: 0>} : vector<8x1xi32>
    %2 = vector.broadcast %0 : i32 to vector<8x1xi32>
    %3 = arith.addi %2, %1 : vector<8x1xi32>
    %c8_i32_0 = arith.constant 8 : i32
    %4 = vector.broadcast %c8_i32_0 : i32 to vector<8x1xi32>
    %5 = arith.cmpi slt, %3, %4 : vector<8x1xi32>
    %c0 = arith.constant 0 : index
    %c0_1 = arith.constant 0 : index
    %6 = vector.load %arg1[%c0, %c0_1] : memref<8x128xf32, #tpu.memory_space<vmem>>, vector<8x128xf32>
    %cst = arith.constant 0.000000e+00 : f32
    %7 = vector.shape_cast %5 : vector<8x1xi1> to vector<8x1xi1>
    %8 = vector.broadcast %7 : vector<8x1xi1> to vector<8x128xi1>
    %9 = vector.broadcast %cst : f32 to vector<8x128xf32>
    %10 = arith.select %8, %6, %9 : vector<8x128xi1>, vector<8x128xf32>
    %c0_2 = arith.constant 0 : index
    %c0_3 = arith.constant 0 : index
    %11 = vector.load %arg2[%c0_2, %c0_3] : memref<8x1xi32, #tpu.memory_space<vmem>>, vector<8x1xi32>
    %cst_4 = arith.constant dense<0xFF800000> : vector<8xf32>
    %12 = vector.multi_reduction <maximumf>, %10, %cst_4 [1] : vector<8x128xf32> to vector<8xf32>
    %13 = vector.shape_cast %12 : vector<8xf32> to vector<8x1xf32>
    %14 = vector.broadcast %13 : vector<8x1xf32> to vector<8x128xf32>
    %15 = arith.subf %10, %14 : vector<8x128xf32>
    %16 = math.exp %15 : vector<8x128xf32>
    %cst_5 = arith.constant dense<0.000000e+00> : vector<8xf32>
    %17 = vector.multi_reduction <add>, %16, %cst_5 [1] : vector<8x128xf32> to vector<8xf32>
    %18 = vector.shape_cast %17 : vector<8xf32> to vector<8x1xf32>
    %19 = math.log %18 : vector<8x1xf32>
    %20 = arith.addf %13, %19 : vector<8x1xf32>
    %21 = tpu.iota {dimensions = array<i32: 1>} : vector<8x128xi32>
    %22 = vector.broadcast %11 : vector<8x1xi32> to vector<8x128xi32>
    %23 = arith.cmpi eq, %21, %22 : vector<8x128xi32>
    %cst_6 = arith.constant 0.000000e+00 : f32
    %24 = vector.broadcast %cst_6 : f32 to vector<8x128xf32>
    %25 = arith.select %23, %10, %24 : vector<8x128xi1>, vector<8x128xf32>
    %cst_7 = arith.constant dense<0.000000e+00> : vector<8xf32>
    %26 = vector.multi_reduction <add>, %25, %cst_7 [1] : vector<8x128xf32> to vector<8xf32>
    %27 = vector.shape_cast %26 : vector<8xf32> to vector<8x1xf32>
    %28 = arith.subf %27, %20 : vector<8x1xf32>
    %cst_8 = arith.constant dense<0.000000e+00> : vector<8xf32>
    %29 = vector.multi_reduction <add>, %10, %cst_8 [1] : vector<8x128xf32> to vector<8xf32>
    %30 = vector.shape_cast %29 : vector<8xf32> to vector<8x1xf32>
    %cst_9 = arith.constant 1.280000e+02 : f32
    %31 = vector.broadcast %cst_9 : f32 to vector<8x1xf32>
    %32 = arith.mulf %31, %20 : vector<8x1xf32>
    %33 = arith.subf %30, %32 : vector<8x1xf32>
    %cst_10 = arith.constant -0.899999976 : f32
    %34 = vector.broadcast %cst_10 : f32 to vector<8x1xf32>
    %35 = arith.mulf %34, %28 : vector<8x1xf32>
    %cst_11 = arith.constant -7.812500e-04 : f32
    %36 = vector.broadcast %cst_11 : f32 to vector<8x1xf32>
    %37 = arith.mulf %36, %33 : vector<8x1xf32>
    %38 = arith.addf %35, %37 : vector<8x1xf32>
    %cst_12 = arith.constant 0.000000e+00 : f32
    %39 = vector.broadcast %cst_12 : f32 to vector<8x1xf32>
    %40 = arith.select %5, %38, %39 : vector<8x1xi1>, vector<8x1xf32>
    %41 = vector.shape_cast %40 : vector<8x1xf32> to vector<1x8x1xf32>
    %cst_13 = arith.constant dense<0.000000e+00> : vector<1xf32>
    %42 = vector.multi_reduction <add>, %41, %cst_13 [1, 2] : vector<1x8x1xf32> to vector<1xf32>
    %43 = vector.shape_cast %42 : vector<1xf32> to vector<1x1x1xf32>
    %44 = vector.extract %43[0, 0, 0] : f32 from vector<1x1x1xf32>
    %c0_14 = arith.constant 0 : index
    %c0_15 = arith.constant 0 : index
    %45 = memref.load %arg3[%c0_14, %c0_15] : memref<1x1xf32, #tpu.memory_space<smem>>
    memref.store %44, %arg3[%c0_14, %c0_15] : memref<1x1xf32, #tpu.memory_space<smem>>
    return
  }
  func.func @transform_0(%arg0: i32) -> (i32, i32) {
    %c0_i32 = arith.constant 0 : i32
    %c0_i32_0 = arith.constant 0 : i32
    return %arg0, %c0_i32 : i32, i32
  }
  func.func @transform_1(%arg0: i32) -> (i32, i32) {
    %c0_i32 = arith.constant 0 : i32
    %c0_i32_0 = arith.constant 0 : i32
    return %arg0, %c0_i32 : i32, i32
  }
  func.func @transform_2(%arg0: i32) -> (i32, i32) {
    %c0_i32 = arith.constant 0 : i32
    %c0_i32_0 = arith.constant 0 : i32
    return %arg0, %c0_i32 : i32, i32
  }
}

</mosaic_0001>

<llo_original>
// kernel: tpu_custom_call.1
$region0: #{tpu_custom_call.1}
  #allocation0 [shape = 'u32[]', space=smem, size = 0x4, offset = 0x4, fixed_abs, tag = 'smem constant byte address 0x4 - core index']
  #allocation1 [shape = 'u32[144,128]{1,0:T(1,128)}', space=vmem, size = 0x12000, scoped, tag = 'internal scratch']
  %s0 = inlined_call_operand.vmem [shape: f32[8,128], index: 0, kind: input, shape index: {}]
  %s1 = inlined_call_operand.vmem [shape: s32[8,1], index: 1, kind: input, shape index: {}]
  %s2 = inlined_call_operand.hbm [shape: f32[1,1], index: 2, kind: output, shape index: {}]
  %s3 = sld [smem:[#allocation0]]
  $region18: #{tpu_custom_call.1} parent=0
    _
  %s5 = ssub.s32 1, %s3
  %s6 = scalar_select 0, %s5, %s3
  $region1: #{tpu_custom_call.1} parent=0
    #allocation2 [shape = 'u8[512]{0}', space=smem, size = 0x200, scoped, tag = 'output window, operand 0, single buffered']
    #allocation3 [shape = 's32[1]{0}', space=sflag, size = 0x4, scoped, tag = 'scoped memory for tpu_custom_call.1']
    %7 = vsyncpa [#allocation3], 0
    // Predicated region
    $region2: #{tpu_custom_call.1} parent=1 // pred_check
      _
    $region3: #{tpu_custom_call.1} parent=1 // pred_check_branch
      %9 = sbr.rel (0) target = $region5
    $region4: #{tpu_custom_call.1} parent=1 // pred_region
      _
    $region5: #{tpu_custom_call.1} parent=1 // pred_fallthru
      _
    // Predicated region
    $region6: #{tpu_custom_call.1} parent=1 // pred_check
      _
    $region7: #{tpu_custom_call.1} parent=1 // pred_check_branch
      %11 = sbr.rel (0) target = $region9
    $region8: #{tpu_custom_call.1} parent=1 // pred_region
      _
    $region9: #{tpu_custom_call.1} parent=1 // pred_fallthru
      _
    %s12 = smul.u32 0, 8
    %v13 = vlaneseq
    %v14 = vshrl.u32 %v13, 7
    %v15 = vstv %s12
    %v16 = vadd.s32 %v15, %v14
    %vm17 = vcmp.lt.s32.totalorder %v16, 8
    %v18 = vld [vmem:[%s0] sm:$0xff]
    %v19 = vsel %vm17, 1, 0
    %vm20 = vcmp.eq.s32.totalorder %v19, 1
    %v21 = vsel %vm20, %v18, 0.0
    %v22 = vld [vmem:[%s1] sm:$0xff]
    %23 = vmax.xlane.f32.xlu0 %v21
    %v24 = vpop.xlane.xlu0 %23
    %v25 = vsub.f32 %v21, %v24
    %v26 = vmul.f32 %v25, 1.442695
    %v27 = vpow.pop %v26
    %28 = vadd.xlane.f32.xlu0 %v27
    %v29 = vpop.xlane.xlu0 %28
    %v30 = vlog2.pop %v29
    %v31 = vmul.f32 %v30, 0.6931472
    %v32 = vadd.f32 %v24, %v31
    %v33 = vlaneseq
    %v34 = vand.u32 %v33, 127
    %35 = vset.pattern.permute.xlu0 0
    %36 = vperm.xlu0 %35, %v22
    %v37 = vpop.permute.xlu0 %36
    %vm38 = vcmp.eq.s32.totalorder %v34, %v37
    %v39 = vsel %vm38, %v21, 0.0
    %40 = vadd.xlane.f32.xlu0 %v39
    %v41 = vpop.xlane.xlu0 %40
    %v42 = vsub.f32 %v41, %v32
    %43 = vadd.xlane.f32.xlu0 %v21
    %v44 = vpop.xlane.xlu0 %43
    %v45 = vmul.f32 %v32, 128.0
    %v46 = vsub.f32 %v44, %v45
    %v47 = vmul.f32 %v42, -0.9
    %v48 = vmul.f32 %v46, -0.00078125
    %v49 = vadd.f32 %v47, %v48
    %v50 = vsel %vm17, %v49, 0.0
    %vm51 = vcmask 7168
    %v52 = vsel %vm51, %v50, 0.0
    %53 = vadd.xlane.f32.xlu0 %v52
    %v54 = vpop.xlane.xlu0 %53
    %v55 = vrot.slane %v54, 4
    %v56 = vadd.f32 %v54, %v55
    %v57 = vrot.slane %v56, 2
    %v58 = vadd.f32 %v56, %v57
    %v59 = vrot.slane %v58, 1
    %v60 = vadd.f32 %v58, %v59
    %s61 = vtos %v60
    %s62 = scalar_lea.smem [#allocation2], 0
    %63 = sst [smem:[%s62]] %s61
    // Predicated region
    $region10: #{tpu_custom_call.1} parent=1 // pred_check
      _
    $region11: #{tpu_custom_call.1} parent=1 // pred_check_branch
      %65 = sbr.rel (0) target = $region13
    $region12: #{tpu_custom_call.1} parent=1 // pred_region
      %s67 = ssub.s32 16, 16
      %68 = vsyncadd [#allocation3], %s67
      %71 = dma.smem_to_hbm [#allocation2], 16, %s2, [#allocation3]
    $region13: #{tpu_custom_call.1} parent=1 // pred_fallthru
      _
    // Predicated region
    $region14: #{tpu_custom_call.1} parent=1 // pred_check
      _
    $region15: #{tpu_custom_call.1} parent=1 // pred_check_branch
      %73 = sbr.rel (0) target = $region17
    $region16: #{tpu_custom_call.1} parent=1 // pred_region
      %74 = dma.done [#allocation3], 16
    $region17: #{tpu_custom_call.1} parent=1 // pred_fallthru
      _
    %75 = sfence
    %76 = vsyncpa [#allocation3], 1

</llo_original>
